<compile_context>
chip_gen: v7x
topology: tpu7x:2x2x1
jax: 0.10.0
libtpu: 0.0.40
codegen_flags: <defaults>
</compile_context>

<pallas_src>
import jax
import jax.numpy as jnp
from jax.experimental import pallas as pl
from jax.experimental.pallas import tpu as pltpu


def _spatial_scale_kernel(x_ref, w_ref, o_ref):
    # x_ref: (TM, L), w_ref: (1, L) -> sublane-broadcast multiply on the VPU.
    o_ref[...] = (x_ref[...] * w_ref[...]).astype(o_ref.dtype)


def spatial_scale_2d(x, weight, *, target_block_bytes=4 * 1024 * 1024):
    """y = x * weight, weight broadcast over the leading (N, C) axes.

    x:      (N, C, H, W)
    weight: (H, W)
    """
    N, C, H, W = x.shape
    assert weight.shape == (H, W), "weight must match the spatial dims of x"

    R = N * C
    L = H * W

    # Lane-dense 2-D views; cast weight once in the wrapper so the in-kernel
    # multiply stays in x.dtype (no per-step promotion / broadcast work).
    x2 = x.reshape(R, L)
    w2 = weight.astype(x.dtype).reshape(1, L)

    bytes_per_row = L * x.dtype.itemsize
    # Row-block height: multiple of 8 sublanes, sized so one block is roughly
    # target_block_bytes; capped at R (a full-extent block is always legal).
    tm = max(8, (target_block_bytes // bytes_per_row) // 8 * 8)
    if tm >= R:
        tm = R
    grid = (pl.cdiv(R, tm),)

    out2 = pl.pallas_call(
        _spatial_scale_kernel,
        out_shape=jax.ShapeDtypeStruct((R, L), x.dtype),
        grid_spec=pl.GridSpec(
            grid=grid,
            in_specs=[
                # one large lane-dense row-block of x per grid step
                pl.BlockSpec((tm, L), lambda i: (i, 0)),
                # shared weight row, VMEM-resident (constant block index)
                pl.BlockSpec((1, L), lambda i: (0, 0)),
            ],
            out_specs=pl.BlockSpec((tm, L), lambda i: (i, 0)),
        ),
        compiler_params=pltpu.CompilerParams(
            # parallel row-block axis -> megacore sharding on v7x, no-op elsewhere
            dimension_semantics=("parallel",),
            # explicit scoped-VMEM budget: > v5e's 16 MiB default, < v7x's 64 MiB physical
            vmem_limit_bytes=32 * 1024 * 1024,
        ),
    )(x2, w2)

    return out2.reshape(N, C, H, W)


if __name__ == "__main__":
    key = jax.random.PRNGKey(0)
    kx, kw = jax.random.split(key)

    N, C, H, W = 2, 4, 16, 16
    x = jax.random.normal(kx, (N, C, H, W), dtype=jnp.float32)
    # nn.Parameter(torch.zeros(H, W)) is an all-zero init; use a deterministic
    # random weight of the same shape so the multiply is non-trivially
    # exercised (forward semantics are identical).
    weight = jax.random.normal(kw, (H, W), dtype=jnp.float32)

    y = spatial_scale_2d(x, weight)
    y = jax.block_until_ready(y)

    # reference check against plain-JAX broadcasting semantics
    y_ref = x * weight[None, None, :, :]
    assert y.shape == x.shape
    assert jnp.allclose(y, y_ref, atol=1e-6, rtol=1e-6)

    print("KERNEL_OK")
</pallas_src>

<mosaic_0001>
module attributes {stable_mosaic.version = 11 : i64} {
  func.func @_spatial_scale_kernel(%arg0: i32, %arg1: memref<8x256xf32, #tpu.memory_space<vmem>>, %arg2: memref<1x256xf32, #tpu.memory_space<vmem>>, %arg3: memref<8x256xf32, #tpu.memory_space<vmem>>) attributes {dimension_semantics = [#tpu.dimension_semantics<parallel>], iteration_bounds = array<i64: 1>, scalar_prefetch = 0 : i64, scratch_operands = 0 : i64, tpu.core_type = #tpu.core_type<tc>, window_params = [{transform_indices = @transform_0, window_bounds = array<i64: 8, 256>}, {pipeline_mode = #tpu.pipeline_mode<synchronous>, transform_indices = @transform_1, window_bounds = array<i64: 1, 256>}, {transform_indices = @transform_2, window_bounds = array<i64: 8, 256>}]} {
    %c0 = arith.constant 0 : index
    %c0_0 = arith.constant 0 : index
    %0 = vector.load %arg1[%c0, %c0_0] : memref<8x256xf32, #tpu.memory_space<vmem>>, vector<8x256xf32>
    %c0_1 = arith.constant 0 : index
    %c0_2 = arith.constant 0 : index
    %1 = vector.load %arg2[%c0_1, %c0_2] : memref<1x256xf32, #tpu.memory_space<vmem>>, vector<1x256xf32>
    %2 = vector.broadcast %1 : vector<1x256xf32> to vector<8x256xf32>
    %3 = arith.mulf %0, %2 : vector<8x256xf32>
    %c0_3 = arith.constant 0 : index
    %c0_4 = arith.constant 0 : index
    %4 = vector.load %arg3[%c0_3, %c0_4] : memref<8x256xf32, #tpu.memory_space<vmem>>, vector<8x256xf32>
    tpu.vector_store %arg3[%c0_3, %c0_4], %3 {strides = array<i32>} : memref<8x256xf32, #tpu.memory_space<vmem>>, vector<8x256xf32>,
    return
  }
  func.func @transform_0(%arg0: i32) -> (i32, i32) {
    %c0_i32 = arith.constant 0 : i32
    %c0_i32_0 = arith.constant 0 : i32
    return %arg0, %c0_i32 : i32, i32
  }
  func.func @transform_1(%arg0: i32) -> (i32, i32) {
    %c0_i32 = arith.constant 0 : i32
    %c0_i32_0 = arith.constant 0 : i32
    %c0_i32_1 = arith.constant 0 : i32
    return %c0_i32, %c0_i32_0 : i32, i32
  }
  func.func @transform_2(%arg0: i32) -> (i32, i32) {
    %c0_i32 = arith.constant 0 : i32
    %c0_i32_0 = arith.constant 0 : i32
    return %arg0, %c0_i32 : i32, i32
  }
}

</mosaic_0001>

<llo_original>
// kernel: tpu_custom_call.1
$region0: #{tpu_custom_call.1}
  #allocation0 [shape = 'u32[]', space=smem, size = 0x4, offset = 0x4, fixed_abs, tag = 'smem constant byte address 0x4 - core index']
  #allocation1 [shape = 'u32[144,128]{1,0:T(1,128)}', space=vmem, size = 0x12000, scoped, tag = 'internal scratch']
  %s0 = inlined_call_operand.hbm [shape: f32[8,256], index: 0, kind: input, shape index: {}]
  %s1 = inlined_call_operand.vmem [shape: f32[1,256], index: 1, kind: input, shape index: {}]
  %s2 = inlined_call_operand.hbm [shape: f32[8,256], index: 2, kind: output, shape index: {}]
  %s3 = sld [smem:[#allocation0]]
  $region22: #{tpu_custom_call.1} parent=0
    _
  %s5 = ssub.s32 1, %s3
  %s6 = scalar_select 0, %s5, %s3
  $region1: #{tpu_custom_call.1} parent=0
    #allocation2 [shape = 'u8[8192]{0}', space=vmem, size = 0x2000, scoped, tag = 'input window, operand 0, single buffered']
    #allocation3 [shape = 's32[1]{0}', space=sflag, size = 0x4, scoped, tag = 'scoped memory for tpu_custom_call.1']
    #allocation4 [shape = 's32[1]{0}', space=sflag, size = 0x4, scoped, tag = 'scoped memory for tpu_custom_call.1']
    #allocation5 [shape = 'u8[8192]{0}', space=vmem, size = 0x2000, scoped, tag = 'output window, operand 0, single buffered']
    %7 = vsyncpa [#allocation3], 0
    %8 = vsyncpa [#allocation4], 0
    // Predicated region
    $region2: #{tpu_custom_call.1} parent=1 // pred_check
      _
    $region3: #{tpu_custom_call.1} parent=1 // pred_check_branch
      %10 = sbr.rel (0) target = $region5
    $region4: #{tpu_custom_call.1} parent=1 // pred_region
      %s12 = ssub.s32 256, 256
      %13 = vsyncadd [#allocation3], %s12
      %s15 = sshll.u32 [#allocation2], 4
      %s16 = int_to_ptr.vmem [resolvable:$true] %s15
      %18 = dma.hbm_to_vmem [thread:$0]  %s0, 256, %s16, [#allocation3]
    $region5: #{tpu_custom_call.1} parent=1 // pred_fallthru
      _
    // Predicated region
    $region6: #{tpu_custom_call.1} parent=1 // pred_check
      _
    $region7: #{tpu_custom_call.1} parent=1 // pred_check_branch
      %20 = sbr.rel (0) target = $region9
    $region8: #{tpu_custom_call.1} parent=1 // pred_region
      _
    $region9: #{tpu_custom_call.1} parent=1 // pred_fallthru
      _
    // Predicated region
    $region10: #{tpu_custom_call.1} parent=1 // pred_check
      _
    $region11: #{tpu_custom_call.1} parent=1 // pred_check_branch
      %22 = sbr.rel (0) target = $region13
    $region12: #{tpu_custom_call.1} parent=1 // pred_region
      %23 = dma.done [#allocation3], 256
    $region13: #{tpu_custom_call.1} parent=1 // pred_fallthru
      _
    %v24 = vld [vmem:[#allocation2] sm:$0xff]
    %v25 = vld [vmem:[#allocation2 + $0x8] sm:$0xff]
    %v26 = vld [vmem:[%s1] sm:$0x3]
    %v28 = vlaneseq
    %v29 = vshrl.u32 %v28, 7
    %v30 = vsub.s32 0, %v29
    %v31 = vrot.slane %v26, %v30
    %v32 = vlaneseq
    %v33 = vshrl.u32 %v32, 7
    %v34 = vsub.s32 1, %v33
    %v35 = vrot.slane %v26, %v34
    %v38 = vmul.f32 %v24, %v31
    %v39 = vmul.f32 %v25, %v35
    %40 = vst [vmem:[#allocation5] sm:$0xff] %v38
    %41 = vst [vmem:[#allocation5 + $0x8] sm:$0xff] %v39
    // Predicated region
    $region14: #{tpu_custom_call.1} parent=1 // pred_check
      _
    $region15: #{tpu_custom_call.1} parent=1 // pred_check_branch
      %43 = sbr.rel (0) target = $region17
    $region16: #{tpu_custom_call.1} parent=1 // pred_region
      %s45 = ssub.s32 256, 256
      %46 = vsyncadd [#allocation4], %s45
      %s48 = sshll.u32 [#allocation5], 4
      %s49 = int_to_ptr.vmem [resolvable:$true] %s48
      %51 = dma.vmem_to_hbm [thread:$0]  %s49, 256, %s2, [#allocation4]
    $region17: #{tpu_custom_call.1} parent=1 // pred_fallthru
      _
    // Predicated region
    $region18: #{tpu_custom_call.1} parent=1 // pred_check
      _
    $region19: #{tpu_custom_call.1} parent=1 // pred_check_branch
      %53 = sbr.rel (0) target = $region21
    $region20: #{tpu_custom_call.1} parent=1 // pred_region
      %54 = dma.done [#allocation4], 256
    $region21: #{tpu_custom_call.1} parent=1 // pred_fallthru
      _
    %55 = vsyncpa [#allocation3], 1
    %56 = vsyncpa [#allocation4], 1

</llo_original>
